<compile_context>
chip_gen: v5e
topology: v5e:2x2
jax: 0.10.0
libtpu: 0.0.40
codegen_flags: <defaults>
</compile_context>

<pallas_src>
import functools

import jax
import jax.numpy as jnp
from jax.experimental import pallas as pl
from jax.experimental.pallas import tpu as pltpu


def _sepconv_kernel(x_ref, wd_ref, wp_ref, o_ref, *, H, W, KH, KW, PH, PW, Cin):
    """One batch item: fused depthwise (groups=Cin) KHxKW conv + 1x1 pointwise conv.

    x_ref  : (1, Cin, H*W)     flattened NCHW input block (VMEM), lane-dense
    wd_ref : (Cin, KH*KW) f32  depthwise weights (VMEM)
    wp_ref : (Cout, Cin)  f32  pointwise weights (VMEM)
    o_ref  : (1, Cout, H*W)    flattened output block (VMEM)
    """
    HW = H * W
    # Single f32 cast of the whole slab (no per-tap casts, no padded scratch).
    x = x_ref[0].astype(jnp.float32)                          # (Cin, HW)

    # Flattened lane index; used to mask the zero-padding halo of each shifted tap.
    lane = jax.lax.broadcasted_iota(jnp.int32, (Cin, HW), 1)
    if W & (W - 1) == 0:
        w_idx = lane & (W - 1)                                # cheap bit-and for pow2 W
    else:
        w_idx = lane % W  # TODO(synk): non-power-of-two W relies on vector int modulo

    # --- depthwise conv: KH*KW taps, each applied to ALL channels at once ----------
    # tap(dh, dw)[i] = x[i + dh*W + dw] for in-bounds positions, 0 in the padding halo.
    acc = None
    for kh in range(KH):
        for kw in range(KW):
            dh = kh - PH
            dw = kw - PW
            s = dh * W + dw                                   # flattened input offset
            tap = x if s == 0 else pltpu.roll(x, shift=(-s) % HW, axis=1)

            mask = None
            if dh < 0:                                        # need h >= -dh
                mask = lane >= (-dh) * W
            elif dh > 0:                                      # need h < H - dh
                mask = lane < (H - dh) * W
            if dw < 0:                                        # need w >= -dw
                mw = w_idx >= -dw
                mask = mw if mask is None else (mask & mw)
            elif dw > 0:                                      # need w < W - dw
                mw = w_idx < (W - dw)
                mask = mw if mask is None else (mask & mw)
            if mask is not None:
                tap = jnp.where(mask, tap, 0.0)

            k = kh * KW + kw
            wcol = wd_ref[:, k:k + 1]                         # (Cin, 1) weight column
            term = tap * wcol                                 # lane-broadcast MAC
            acc = term if acc is None else acc + term         # (Cin, HW) f32

    # --- pointwise 1x1 conv: Cin broadcast-MACs over (Cout, HW) slabs ---------------
    # MXU is skipped on purpose at Cin=4 / Cout=8 (<1% utilization); for large channel
    # counts use jnp.dot(wp_ref[...], acc, preferred_element_type=jnp.float32) instead.
    out = None
    for c in range(Cin):
        term = acc[c:c + 1, :] * wp_ref[:, c:c + 1]           # (1,HW)*(Cout,1)->(Cout,HW)
        out = term if out is None else out + term

    o_ref[0] = out.astype(o_ref.dtype)                        # single lane-dense store


def separable_conv2d(x_nchw, w_depthwise, w_pointwise, *, kernel_size, padding,
                     stride=1, dilation=1):
    """x_nchw: (N, Cin, H, W); w_depthwise: (Cin, 1, KH, KW); w_pointwise: (Cout, Cin, 1, 1)."""
    if stride != 1 or dilation != 1:
        # TODO(synk): stride/dilation variants not implemented.
        raise NotImplementedError("only stride=1, dilation=1 is implemented")

    N, Cin, H, W = x_nchw.shape
    KH = KW = kernel_size
    Cout = w_pointwise.shape[0]
    Ho = H + 2 * padding - (KH - 1)
    Wo = W + 2 * padding - (KW - 1)
    # Roll+mask tap scheme assumes a same-size output (2*padding == kernel_size - 1),
    # which covers the module default (k=1, p=0) and the Xception usage (k=3, p=1).
    assert Ho == H and Wo == W, "only 'same'-size configs are implemented"

    HW = H * W
    x_flat = x_nchw.reshape(N, Cin, HW)                       # free for contiguous NCHW
    wd = w_depthwise.astype(jnp.float32).reshape(Cin, KH * KW)
    wp = w_pointwise.astype(jnp.float32).reshape(Cout, Cin)

    kernel = functools.partial(_sepconv_kernel, H=H, W=W, KH=KH, KW=KW,
                               PH=padding, PW=padding, Cin=Cin)

    out_flat = pl.pallas_call(
        kernel,
        out_shape=jax.ShapeDtypeStruct((N, Cout, HW), x_nchw.dtype),
        grid_spec=pltpu.PrefetchScalarGridSpec(
            num_scalar_prefetch=0,
            # One batch item per step: keeps >=2 parallel steps for v7x megacore; at
            # these sizes per-step overhead is negligible on single-TC v5e/v6e too.
            grid=(N,),
            in_specs=[
                pl.BlockSpec((1, Cin, HW), lambda n: (n, 0, 0)),
                pl.BlockSpec((Cin, KH * KW), lambda n: (0, 0)),
                pl.BlockSpec((Cout, Cin), lambda n: (0, 0)),
            ],
            out_specs=pl.BlockSpec((1, Cout, HW), lambda n: (n, 0, 0)),
        ),
        compiler_params=pltpu.CompilerParams(
            dimension_semantics=("parallel",),
        ),
    )(x_flat, wd, wp)

    return out_flat.reshape(N, Cout, Ho, Wo)


def _reference(x_nchw, w_depthwise, w_pointwise, *, padding):
    """Pure-JAX reference using lax convolutions (matches PyTorch semantics)."""
    Cin = x_nchw.shape[1]
    y = jax.lax.conv_general_dilated(
        x_nchw, w_depthwise,
        window_strides=(1, 1), padding=[(padding, padding), (padding, padding)],
        dimension_numbers=("NCHW", "OIHW", "NCHW"),
        feature_group_count=Cin)
    y = jax.lax.conv_general_dilated(
        y, w_pointwise,
        window_strides=(1, 1), padding=[(0, 0), (0, 0)],
        dimension_numbers=("NCHW", "OIHW", "NCHW"))
    return y


if __name__ == "__main__":
    # SeparableConv2d(in_channels=4, out_channels=8, kernel_size=3, padding=1, bias=False)
    in_channels, out_channels = 4, 8
    kernel_size, padding = 3, 1
    N, H, W = 2, 16, 16

    key = jax.random.PRNGKey(0)
    kx, kd, kp = jax.random.split(key, 3)

    x = jax.random.normal(kx, (N, in_channels, H, W), dtype=jnp.float32)
    # Deterministic synthetic init (shapes follow the PyTorch module's __init__).
    w_dw = jax.random.normal(kd, (in_channels, 1, kernel_size, kernel_size),
                             dtype=jnp.float32) * 0.1
    w_pw = jax.random.normal(kp, (out_channels, in_channels, 1, 1),
                             dtype=jnp.float32) * 0.1

    out = separable_conv2d(x, w_dw, w_pw, kernel_size=kernel_size, padding=padding)
    jax.block_until_ready(out)

    ref = _reference(x, w_dw, w_pw, padding=padding)
    assert out.shape == ref.shape == (N, out_channels, H, W)
    assert jnp.allclose(out, ref, atol=1e-4, rtol=1e-4)

    print("KERNEL_OK")
</pallas_src>

<mosaic_0001>
module attributes {stable_mosaic.version = 11 : i64} {
  func.func @_sepconv_kernel(%arg0: i32, %arg1: memref<1x4x256xf32, #tpu.memory_space<vmem>>, %arg2: memref<4x9xf32, #tpu.memory_space<vmem>>, %arg3: memref<8x4xf32, #tpu.memory_space<vmem>>, %arg4: memref<1x8x256xf32, #tpu.memory_space<vmem>>) attributes {dimension_semantics = [#tpu.dimension_semantics<parallel>], iteration_bounds = array<i64: 2>, scalar_prefetch = 0 : i64, scratch_operands = 0 : i64, tpu.core_type = #tpu.core_type<tc>, window_params = [{transform_indices = @transform_0, window_bounds = array<i64: 1, 4, 256>}, {pipeline_mode = #tpu.pipeline_mode<synchronous>, transform_indices = @transform_1, window_bounds = array<i64: 4, 9>}, {pipeline_mode = #tpu.pipeline_mode<synchronous>, transform_indices = @transform_2, window_bounds = array<i64: 8, 4>}, {transform_indices = @transform_3, window_bounds = array<i64: 1, 8, 256>}]} {
    %c0 = arith.constant 0 : index
    %c0_0 = arith.constant 0 : index
    %c0_1 = arith.constant 0 : index
    %0 = vector.load %arg1[%c0, %c0_0, %c0_1] : memref<1x4x256xf32, #tpu.memory_space<vmem>>, vector<1x4x256xf32>
    %1 = vector.shape_cast %0 : vector<1x4x256xf32> to vector<4x256xf32>
    %2 = tpu.iota {dimensions = array<i32: 1>} : vector<4x256xi32>
    %c15_i32 = arith.constant 15 : i32
    %3 = vector.broadcast %c15_i32 : i32 to vector<4x256xi32>
    %4 = arith.andi %2, %3 : vector<4x256xi32>
    %c17_i32 = arith.constant 17 : i32
    %5 = tpu.dynamic_rotate %1 by %c17_i32 dim 1 : vector<4x256xf32>, i32 -> vector<4x256xf32>
    %c16_i32 = arith.constant 16 : i32
    %6 = vector.broadcast %c16_i32 : i32 to vector<4x256xi32>
    %7 = arith.cmpi sge, %2, %6 : vector<4x256xi32>
    %c1_i32 = arith.constant 1 : i32
    %8 = vector.broadcast %c1_i32 : i32 to vector<4x256xi32>
    %9 = arith.cmpi sge, %4, %8 : vector<4x256xi32>
    %10 = arith.andi %7, %9 : vector<4x256xi1>
    %cst = arith.constant 0.000000e+00 : f32
    %11 = vector.broadcast %cst : f32 to vector<4x256xf32>
    %12 = arith.select %10, %5, %11 : vector<4x256xi1>, vector<4x256xf32>
    %c0_2 = arith.constant 0 : index
    %c0_3 = arith.constant 0 : index
    %13 = vector.load %arg2[%c0_2, %c0_3] : memref<4x9xf32, #tpu.memory_space<vmem>>, vector<4x1xf32>
    %14 = vector.broadcast %13 : vector<4x1xf32> to vector<4x256xf32>
    %15 = arith.mulf %12, %14 : vector<4x256xf32>
    %c16_i32_4 = arith.constant 16 : i32
    %16 = tpu.dynamic_rotate %1 by %c16_i32_4 dim 1 : vector<4x256xf32>, i32 -> vector<4x256xf32>
    %c16_i32_5 = arith.constant 16 : i32
    %17 = vector.broadcast %c16_i32_5 : i32 to vector<4x256xi32>
    %18 = arith.cmpi sge, %2, %17 : vector<4x256xi32>
    %cst_6 = arith.constant 0.000000e+00 : f32
    %19 = vector.broadcast %cst_6 : f32 to vector<4x256xf32>
    %20 = arith.select %18, %16, %19 : vector<4x256xi1>, vector<4x256xf32>
    %c0_7 = arith.constant 0 : index
    %c1 = arith.constant 1 : index
    %21 = vector.load %arg2[%c0_7, %c1] : memref<4x9xf32, #tpu.memory_space<vmem>>, vector<4x1xf32>
    %22 = vector.broadcast %21 : vector<4x1xf32> to vector<4x256xf32>
    %23 = arith.mulf %20, %22 : vector<4x256xf32>
    %24 = arith.addf %15, %23 : vector<4x256xf32>
    %c15_i32_8 = arith.constant 15 : i32
    %25 = tpu.dynamic_rotate %1 by %c15_i32_8 dim 1 : vector<4x256xf32>, i32 -> vector<4x256xf32>
    %c16_i32_9 = arith.constant 16 : i32
    %26 = vector.broadcast %c16_i32_9 : i32 to vector<4x256xi32>
    %27 = arith.cmpi sge, %2, %26 : vector<4x256xi32>
    %c15_i32_10 = arith.constant 15 : i32
    %28 = vector.broadcast %c15_i32_10 : i32 to vector<4x256xi32>
    %29 = arith.cmpi slt, %4, %28 : vector<4x256xi32>
    %30 = arith.andi %27, %29 : vector<4x256xi1>
    %cst_11 = arith.constant 0.000000e+00 : f32
    %31 = vector.broadcast %cst_11 : f32 to vector<4x256xf32>
    %32 = arith.select %30, %25, %31 : vector<4x256xi1>, vector<4x256xf32>
    %c0_12 = arith.constant 0 : index
    %c2 = arith.constant 2 : index
    %33 = vector.load %arg2[%c0_12, %c2] : memref<4x9xf32, #tpu.memory_space<vmem>>, vector<4x1xf32>
    %34 = vector.broadcast %33 : vector<4x1xf32> to vector<4x256xf32>
    %35 = arith.mulf %32, %34 : vector<4x256xf32>
    %36 = arith.addf %24, %35 : vector<4x256xf32>
    %c1_i32_13 = arith.constant 1 : i32
    %37 = tpu.dynamic_rotate %1 by %c1_i32_13 dim 1 : vector<4x256xf32>, i32 -> vector<4x256xf32>
    %c1_i32_14 = arith.constant 1 : i32
    %38 = vector.broadcast %c1_i32_14 : i32 to vector<4x256xi32>
    %39 = arith.cmpi sge, %4, %38 : vector<4x256xi32>
    %cst_15 = arith.constant 0.000000e+00 : f32
    %40 = vector.broadcast %cst_15 : f32 to vector<4x256xf32>
    %41 = arith.select %39, %37, %40 : vector<4x256xi1>, vector<4x256xf32>
    %c0_16 = arith.constant 0 : index
    %c3 = arith.constant 3 : index
    %42 = vector.load %arg2[%c0_16, %c3] : memref<4x9xf32, #tpu.memory_space<vmem>>, vector<4x1xf32>
    %43 = vector.broadcast %42 : vector<4x1xf32> to vector<4x256xf32>
    %44 = arith.mulf %41, %43 : vector<4x256xf32>
    %45 = arith.addf %36, %44 : vector<4x256xf32>
    %c0_17 = arith.constant 0 : index
    %c4 = arith.constant 4 : index
    %46 = vector.load %arg2[%c0_17, %c4] : memref<4x9xf32, #tpu.memory_space<vmem>>, vector<4x1xf32>
    %47 = vector.broadcast %46 : vector<4x1xf32> to vector<4x256xf32>
    %48 = arith.mulf %1, %47 : vector<4x256xf32>
    %49 = arith.addf %45, %48 : vector<4x256xf32>
    %c255_i32 = arith.constant 255 : i32
    %50 = tpu.dynamic_rotate %1 by %c255_i32 dim 1 : vector<4x256xf32>, i32 -> vector<4x256xf32>
    %c15_i32_18 = arith.constant 15 : i32
    %51 = vector.broadcast %c15_i32_18 : i32 to vector<4x256xi32>
    %52 = arith.cmpi slt, %4, %51 : vector<4x256xi32>
    %cst_19 = arith.constant 0.000000e+00 : f32
    %53 = vector.broadcast %cst_19 : f32 to vector<4x256xf32>
    %54 = arith.select %52, %50, %53 : vector<4x256xi1>, vector<4x256xf32>
    %c0_20 = arith.constant 0 : index
    %c5 = arith.constant 5 : index
    %55 = vector.load %arg2[%c0_20, %c5] : memref<4x9xf32, #tpu.memory_space<vmem>>, vector<4x1xf32>
    %56 = vector.broadcast %55 : vector<4x1xf32> to vector<4x256xf32>
    %57 = arith.mulf %54, %56 : vector<4x256xf32>
    %58 = arith.addf %49, %57 : vector<4x256xf32>
    %c241_i32 = arith.constant 241 : i32
    %59 = tpu.dynamic_rotate %1 by %c241_i32 dim 1 : vector<4x256xf32>, i32 -> vector<4x256xf32>
    %c240_i32 = arith.constant 240 : i32
    %60 = vector.broadcast %c240_i32 : i32 to vector<4x256xi32>
    %61 = arith.cmpi slt, %2, %60 : vector<4x256xi32>
    %c1_i32_21 = arith.constant 1 : i32
    %62 = vector.broadcast %c1_i32_21 : i32 to vector<4x256xi32>
    %63 = arith.cmpi sge, %4, %62 : vector<4x256xi32>
    %64 = arith.andi %61, %63 : vector<4x256xi1>
    %cst_22 = arith.constant 0.000000e+00 : f32
    %65 = vector.broadcast %cst_22 : f32 to vector<4x256xf32>
    %66 = arith.select %64, %59, %65 : vector<4x256xi1>, vector<4x256xf32>
    %c0_23 = arith.constant 0 : index
    %c6 = arith.constant 6 : index
    %67 = vector.load %arg2[%c0_23, %c6] : memref<4x9xf32, #tpu.memory_space<vmem>>, vector<4x1xf32>
    %68 = vector.broadcast %67 : vector<4x1xf32> to vector<4x256xf32>
    %69 = arith.mulf %66, %68 : vector<4x256xf32>
    %70 = arith.addf %58, %69 : vector<4x256xf32>
    %c240_i32_24 = arith.constant 240 : i32
    %71 = tpu.dynamic_rotate %1 by %c240_i32_24 dim 1 : vector<4x256xf32>, i32 -> vector<4x256xf32>
    %c240_i32_25 = arith.constant 240 : i32
    %72 = vector.broadcast %c240_i32_25 : i32 to vector<4x256xi32>
    %73 = arith.cmpi slt, %2, %72 : vector<4x256xi32>
    %cst_26 = arith.constant 0.000000e+00 : f32
    %74 = vector.broadcast %cst_26 : f32 to vector<4x256xf32>
    %75 = arith.select %73, %71, %74 : vector<4x256xi1>, vector<4x256xf32>
    %c0_27 = arith.constant 0 : index
    %c7 = arith.constant 7 : index
    %76 = vector.load %arg2[%c0_27, %c7] : memref<4x9xf32, #tpu.memory_space<vmem>>, vector<4x1xf32>
    %77 = vector.broadcast %76 : vector<4x1xf32> to vector<4x256xf32>
    %78 = arith.mulf %75, %77 : vector<4x256xf32>
    %79 = arith.addf %70, %78 : vector<4x256xf32>
    %c239_i32 = arith.constant 239 : i32
    %80 = tpu.dynamic_rotate %1 by %c239_i32 dim 1 : vector<4x256xf32>, i32 -> vector<4x256xf32>
    %c240_i32_28 = arith.constant 240 : i32
    %81 = vector.broadcast %c240_i32_28 : i32 to vector<4x256xi32>
    %82 = arith.cmpi slt, %2, %81 : vector<4x256xi32>
    %c15_i32_29 = arith.constant 15 : i32
    %83 = vector.broadcast %c15_i32_29 : i32 to vector<4x256xi32>
    %84 = arith.cmpi slt, %4, %83 : vector<4x256xi32>
    %85 = arith.andi %82, %84 : vector<4x256xi1>
    %cst_30 = arith.constant 0.000000e+00 : f32
    %86 = vector.broadcast %cst_30 : f32 to vector<4x256xf32>
    %87 = arith.select %85, %80, %86 : vector<4x256xi1>, vector<4x256xf32>
    %c0_31 = arith.constant 0 : index
    %c8 = arith.constant 8 : index
    %88 = vector.load %arg2[%c0_31, %c8] : memref<4x9xf32, #tpu.memory_space<vmem>>, vector<4x1xf32>
    %89 = vector.broadcast %88 : vector<4x1xf32> to vector<4x256xf32>
    %90 = arith.mulf %87, %89 : vector<4x256xf32>
    %91 = arith.addf %79, %90 : vector<4x256xf32>
    %92 = vector.extract_strided_slice %91 {offsets = [0, 0], sizes = [1, 256], strides = [1, 1]} : vector<4x256xf32> to vector<1x256xf32>
    %c0_32 = arith.constant 0 : index
    %c0_33 = arith.constant 0 : index
    %93 = vector.load %arg3[%c0_32, %c0_33] : memref<8x4xf32, #tpu.memory_space<vmem>>, vector<8x1xf32>
    %94 = vector.broadcast %92 : vector<1x256xf32> to vector<8x256xf32>
    %95 = vector.broadcast %93 : vector<8x1xf32> to vector<8x256xf32>
    %96 = arith.mulf %94, %95 : vector<8x256xf32>
    %97 = vector.extract_strided_slice %91 {offsets = [1, 0], sizes = [1, 256], strides = [1, 1]} : vector<4x256xf32> to vector<1x256xf32>
    %c0_34 = arith.constant 0 : index
    %c1_35 = arith.constant 1 : index
    %98 = vector.load %arg3[%c0_34, %c1_35] : memref<8x4xf32, #tpu.memory_space<vmem>>, vector<8x1xf32>
    %99 = vector.broadcast %97 : vector<1x256xf32> to vector<8x256xf32>
    %100 = vector.broadcast %98 : vector<8x1xf32> to vector<8x256xf32>
    %101 = arith.mulf %99, %100 : vector<8x256xf32>
    %102 = arith.addf %96, %101 : vector<8x256xf32>
    %103 = vector.extract_strided_slice %91 {offsets = [2, 0], sizes = [1, 256], strides = [1, 1]} : vector<4x256xf32> to vector<1x256xf32>
    %c0_36 = arith.constant 0 : index
    %c2_37 = arith.constant 2 : index
    %104 = vector.load %arg3[%c0_36, %c2_37] : memref<8x4xf32, #tpu.memory_space<vmem>>, vector<8x1xf32>
    %105 = vector.broadcast %103 : vector<1x256xf32> to vector<8x256xf32>
    %106 = vector.broadcast %104 : vector<8x1xf32> to vector<8x256xf32>
    %107 = arith.mulf %105, %106 : vector<8x256xf32>
    %108 = arith.addf %102, %107 : vector<8x256xf32>
    %109 = vector.extract_strided_slice %91 {offsets = [3, 0], sizes = [1, 256], strides = [1, 1]} : vector<4x256xf32> to vector<1x256xf32>
    %c0_38 = arith.constant 0 : index
    %c3_39 = arith.constant 3 : index
    %110 = vector.load %arg3[%c0_38, %c3_39] : memref<8x4xf32, #tpu.memory_space<vmem>>, vector<8x1xf32>
    %111 = vector.broadcast %109 : vector<1x256xf32> to vector<8x256xf32>
    %112 = vector.broadcast %110 : vector<8x1xf32> to vector<8x256xf32>
    %113 = arith.mulf %111, %112 : vector<8x256xf32>
    %114 = arith.addf %108, %113 : vector<8x256xf32>
    %c0_40 = arith.constant 0 : index
    %c0_41 = arith.constant 0 : index
    %c0_42 = arith.constant 0 : index
    %115 = vector.load %arg4[%c0_40, %c0_41, %c0_42] : memref<1x8x256xf32, #tpu.memory_space<vmem>>, vector<1x8x256xf32>
    %116 = vector.shape_cast %115 : vector<1x8x256xf32> to vector<8x256xf32>
    %117 = vector.shape_cast %114 : vector<8x256xf32> to vector<1x8x256xf32>
    tpu.vector_store %arg4[%c0_40, %c0_41, %c0_42], %117 {strides = array<i32>} : memref<1x8x256xf32, #tpu.memory_space<vmem>>, vector<1x8x256xf32>,
    return
  }
  func.func @transform_0(%arg0: i32) -> (i32, i32, i32) {
    %c0_i32 = arith.constant 0 : i32
    %c0_i32_0 = arith.constant 0 : i32
    %c0_i32_1 = arith.constant 0 : i32
    return %arg0, %c0_i32, %c0_i32_0 : i32, i32, i32
  }
  func.func @transform_1(%arg0: i32) -> (i32, i32) {
    %c0_i32 = arith.constant 0 : i32
    %c0_i32_0 = arith.constant 0 : i32
    %c0_i32_1 = arith.constant 0 : i32
    return %c0_i32, %c0_i32_0 : i32, i32
  }
  func.func @transform_2(%arg0: i32) -> (i32, i32) {
    %c0_i32 = arith.constant 0 : i32
    %c0_i32_0 = arith.constant 0 : i32
    %c0_i32_1 = arith.constant 0 : i32
    return %c0_i32, %c0_i32_0 : i32, i32
  }
  func.func @transform_3(%arg0: i32) -> (i32, i32, i32) {
    %c0_i32 = arith.constant 0 : i32
    %c0_i32_0 = arith.constant 0 : i32
    %c0_i32_1 = arith.constant 0 : i32
    return %arg0, %c0_i32, %c0_i32_0 : i32, i32, i32
  }
}

</mosaic_0001>

<llo_original>
// kernel: tpu_custom_call.1
$region0: #{tpu_custom_call.1}
  #allocation0 [shape = 'u32[]', space=smem, size = 0x4, offset = 0x4, fixed_abs, tag = 'smem constant byte address 0x4 - core index']
  #allocation1 [shape = 'u32[72,128]{1,0:T(1,128)}', space=vmem, size = 0x9000, scoped, tag = 'internal scratch']
  %s0 = inlined_call_operand.hbm [shape: f32[2,4,256], index: 0, kind: input, shape index: {}]
  %s1 = inlined_call_operand.vmem [shape: f32[4,9], index: 1, kind: input, shape index: {}]
  %s2 = inlined_call_operand.vmem [shape: f32[8,4], index: 2, kind: input, shape index: {}]
  %s3 = inlined_call_operand.hbm [shape: f32[2,8,256], index: 3, kind: output, shape index: {}]
  %s4 = sld [smem:[#allocation0]]
  $region49: #{tpu_custom_call.1} parent=0
    _
  %s6 = ssub.s32 1, %s4
  %s7 = scalar_select 0, %s6, %s4
  $region1: #{tpu_custom_call.1} parent=0
    #allocation2 [shape = 'u8[8192]{0}', space=vmem, size = 0x2000, scoped, tag = 'input window, operand 0']
    #allocation3 [shape = 's32[2]{0}', space=sflag, size = 0x8, scoped, tag = 'scoped memory for tpu_custom_call.1']
    #allocation4 [shape = 's32[2]{0}', space=sflag, size = 0x8, scoped, tag = 'scoped memory for tpu_custom_call.1']
    #allocation5 [shape = 'u8[16384]{0}', space=vmem, size = 0x4000, scoped, tag = 'output window, operand 0']
    %8 = vsyncpa [#allocation3], 0
    %s9 = scalar_lea.sflag [#allocation3], 1
    %10 = vsyncpa %s9, 0
    %11 = vsyncpa [#allocation4], 0
    %s12 = scalar_lea.sflag [#allocation4], 1
    %13 = vsyncpa %s12, 0
    loop: start=0, step=1, limit=4
    $region2: #{tpu_custom_call.1} parent=1 // loop_pre_header
      _
    $region3: #{tpu_custom_call.1} parent=1 // loop_header
      %s15 = sphi 0, %s19
      %p16 = scmp.ge.s32.totalorder %s15, 4
      %s25 = sphi 0, %s27
      %s28 = sphi 0, %s25
      %s29 = sphi 0, %s28
      %s45 = sphi 0, %s29
      %s49 = sphi 0, %s49
      %s51 = sphi 0, %s49
      %s52 = sphi 0, %s51
      %s66 = sphi 0, %s52
      %s70 = sphi 0, %s70
      %s72 = sphi 0, %s70
      %s73 = sphi 0, %s72
      %s87 = sphi 0, %s73
      %s93 = sphi 0, %s95
      %s96 = sphi 0, %s93
      %s97 = sphi 0, %s96
      %s113 = sphi 0, %s97
    $region4: #{tpu_custom_call.1} parent=1 // loop_header_branch
      %18 = sbr.rel (%p16) target = $region8
    $region5: #{tpu_custom_call.1} parent=1 // loop_body
      %s20 = ssub.s32 %s15, 1
      %s21 = ssub.s32 %s15, 2
      %s22 = sadd.s32 %s15, 1
      %s23 = ssub.s32 %s15, %s22
      %p24 = scmp.eq.s32.totalorder %s23, 0
      %s26 = sadd.s32 %s25, 1
      %s27 = scalar_select %p24, %s25, %s26
      %p30 = pneg %p24
      %p31 = scmp.eq.s32.totalorder %s15, 1
      %p32 = por %p30, %p31
      %p33 = scmp.ne.s32.totalorder %s25, %s28
      %p34 = scmp.eq.s32.totalorder %s15, 0
      %p35 = por %p33, %p34
      %p36 = scmp.ne.s32.totalorder %s25, %s28
      %p37 = scmp.eq.s32.totalorder %s20, 1
      %p38 = por %p36, %p37
      %p39 = scmp.ne.s32.totalorder %s28, %s29
      %p40 = scmp.eq.s32.totalorder %s20, 0
      %p41 = por %p39, %p40
      %p42 = scmp.ne.s32.totalorder %s28, %s29
      %p43 = scmp.eq.s32.totalorder %s21, 1
      %p44 = por %p42, %p43
      %p46 = scmp.ne.s32.totalorder %s29, %s45
      %p47 = scmp.eq.s32.totalorder %s21, 0
      %p48 = por %p46, %p47
      %s50 = sadd.s32 %s49, 1
      %p53 = scmp.eq.s32.totalorder %s15, 1
      %p54 = scmp.ne.s32.totalorder %s49, %s51
      %p55 = scmp.eq.s32.totalorder %s15, 0
      %p56 = por %p54, %p55
      %p57 = scmp.ne.s32.totalorder %s49, %s51
      %p58 = scmp.eq.s32.totalorder %s20, 1
      %p59 = por %p57, %p58
      %p60 = scmp.ne.s32.totalorder %s51, %s52
      %p61 = scmp.eq.s32.totalorder %s20, 0
      %p62 = por %p60, %p61
      %p63 = scmp.ne.s32.totalorder %s51, %s52
      %p64 = scmp.eq.s32.totalorder %s21, 1
      %p65 = por %p63, %p64
      %p67 = scmp.ne.s32.totalorder %s52, %s66
      %p68 = scmp.eq.s32.totalorder %s21, 0
      %p69 = por %p67, %p68
      %s71 = sadd.s32 %s70, 1
      %p74 = scmp.eq.s32.totalorder %s15, 1
      %p75 = scmp.ne.s32.totalorder %s70, %s72
      %p76 = scmp.eq.s32.totalorder %s15, 0
      %p77 = por %p75, %p76
      %p78 = scmp.ne.s32.totalorder %s70, %s72
      %p79 = scmp.eq.s32.totalorder %s20, 1
      %p80 = por %p78, %p79
      %p81 = scmp.ne.s32.totalorder %s72, %s73
      %p82 = scmp.eq.s32.totalorder %s20, 0
      %p83 = por %p81, %p82
      %p84 = scmp.ne.s32.totalorder %s72, %s73
      %p85 = scmp.eq.s32.totalorder %s21, 1
      %p86 = por %p84, %p85
      %p88 = scmp.ne.s32.totalorder %s73, %s87
      %p89 = scmp.eq.s32.totalorder %s21, 0
      %p90 = por %p88, %p89
      %s91 = ssub.s32 %s15, %s22
      %p92 = scmp.eq.s32.totalorder %s91, 0
      %s94 = sadd.s32 %s93, 1
      %s95 = scalar_select %p92, %s93, %s94
      %p98 = pneg %p92
      %p99 = scmp.eq.s32.totalorder %s15, 1
      %p100 = por %p98, %p99
      %p101 = scmp.ne.s32.totalorder %s93, %s96
      %p102 = scmp.eq.s32.totalorder %s15, 0
      %p103 = por %p101, %p102
      %p104 = scmp.ne.s32.totalorder %s93, %s96
      %p105 = scmp.eq.s32.totalorder %s20, 1
      %p106 = por %p104, %p105
      %p107 = scmp.ne.s32.totalorder %s96, %s97
      %p108 = scmp.eq.s32.totalorder %s20, 0
      %p109 = por %p107, %p108
      %p110 = scmp.ne.s32.totalorder %s96, %s97
      %p111 = scmp.eq.s32.totalorder %s21, 1
      %p112 = por %p110, %p111
      %p114 = scmp.ne.s32.totalorder %s97, %s113
      %p115 = scmp.eq.s32.totalorder %s21, 0
      %p116 = por %p114, %p115
      %p117 = scmp.le.s32.totalorder 1, %s15
      %p118 = scmp.lt.s32.totalorder %s15, 3
      %p119 = pnand %p117, %p118
      %p120 = pneg %p119
      // Predicated region
      $region9: #{tpu_custom_call.1} parent=5 // pred_check
        _
      $region10: #{tpu_custom_call.1} parent=5 // pred_check_branch
        %122 = sbr.rel (%p119) target = $region12
      $region11: #{tpu_custom_call.1} parent=5 // pred_region
        %s123 = ssub.s32 %s15, 1
        // Predicated region
        $region13: #{tpu_custom_call.1} parent=11 // pred_check
          %p124 = pneg %p62
        $region14: #{tpu_custom_call.1} parent=11 // pred_check_branch
          %126 = sbr.rel (%p124) target = $region16
        $region15: #{tpu_custom_call.1} parent=11 // pred_region
          _
        $region16: #{tpu_custom_call.1} parent=11 // pred_fallthru
          _
        // Predicated region
        $region17: #{tpu_custom_call.1} parent=11 // pred_check
          %p127 = pneg %p83
        $region18: #{tpu_custom_call.1} parent=11 // pred_check_branch
          %129 = sbr.rel (%p127) target = $region20
        $region19: #{tpu_custom_call.1} parent=11 // pred_region
          _
        $region20: #{tpu_custom_call.1} parent=11 // pred_fallthru
          _
      $region12: #{tpu_custom_call.1} parent=5 // pred_fallthru
        _
      %p130 = scmp.lt.s32.totalorder %s15, 2
      // Predicated region
      $region21: #{tpu_custom_call.1} parent=5 // pred_check
        %p131 = pneg %p130
      $region22: #{tpu_custom_call.1} parent=5 // pred_check_branch
        %133 = sbr.rel (%p131) target = $region24
      $region23: #{tpu_custom_call.1} parent=5 // pred_region
        // Predicated region
        $region25: #{tpu_custom_call.1} parent=23 // pred_check
          %p134 = pneg %p35
        $region26: #{tpu_custom_call.1} parent=23 // pred_check_branch
          %136 = sbr.rel (%p134) target = $region28
        $region27: #{tpu_custom_call.1} parent=23 // pred_region
          %s137 = sand.u32 %s25, 1
          %s138 = scalar_lea.sflag [#allocation3], %s137
          %s139 = sand.u32 %s25, 1
          %s140 = smul.addr %s139, 8
          %s141 = scalar_lea.vmem [#allocation2], %s140
          %143 = vsyncadd %s138, 0
          %s144 = smul.addr %s15, 2
          %s145 = smul.addr %s144, 4
          %s146 = scalar_lea.hbm %s0, %s145
          %s148 = sshll.u32 %s146, 4
          %s149 = int_to_ptr.hbm [resolvable:$true] %s148
          %s150 = sshll.u32 %s141, 4
          %s151 = int_to_ptr.vmem [resolvable:$true] %s150
          %153 = dma.hbm_to_vmem [thread:$0]  %s149, 128, %s151, %s138
        $region28: #{tpu_custom_call.1} parent=23 // pred_fallthru
          _
      $region24: #{tpu_custom_call.1} parent=5 // pred_fallthru
        _
      %p154 = scmp.le.s32.totalorder 1, %s15
      %p155 = scmp.lt.s32.totalorder %s15, 3
      %p156 = pnand %p154, %p155
      %p157 = pneg %p156
      // Predicated region
      $region29: #{tpu_custom_call.1} parent=5 // pred_check
        _
      $region30: #{tpu_custom_call.1} parent=5 // pred_check_branch
        %159 = sbr.rel (%p156) target = $region32
      $region31: #{tpu_custom_call.1} parent=5 // pred_region
        %s160 = ssub.s32 %s15, 1
        %s161 = sand.u32 %s28, 1
        %s162 = scalar_lea.sflag [#allocation3], %s161
        %s163 = sand.u32 %s28, 1
        %s164 = smul.addr %s163, 8
        %s165 = scalar_lea.vmem [#allocation2], %s164
        // Predicated region
        $region33: #{tpu_custom_call.1} parent=31 // pred_check
          %p166 = pneg %p41
        $region34: #{tpu_custom_call.1} parent=31 // pred_check_branch
          %168 = sbr.rel (%p166) target = $region36
        $region35: #{tpu_custom_call.1} parent=31 // pred_region
          %170 = dma.done %s162, 128
        $region36: #{tpu_custom_call.1} parent=31 // pred_fallthru
          _
        %s171 = sand.u32 %s28, 1
        %s172 = scalar_lea.sflag [#allocation3], %s171
        %s173 = sand.u32 %s28, 1
        %s174 = smul.addr %s173, 8
        %s175 = scalar_lea.vmem [#allocation2], %s174
        %p176 = pneg %p41
        %p177 = pneg %p38
        %p178 = pneg %p62
        %p179 = pneg %p59
        %p180 = pneg %p83
        %p181 = pneg %p80
        %p182 = pneg %p109
        %p183 = pneg %p106
        %s184 = sand.u32 %s96, 1
        %s185 = scalar_lea.sflag [#allocation4], %s184
        %s186 = sand.u32 %s96, 1
        %s187 = smul.addr %s186, 16
        %s188 = scalar_lea.vmem [#allocation5], %s187
        %v189 = vld [vmem:[%s165] sm:$0xff]
        %v190 = vlaneseq
        %v191 = vand.u32 %v190, 127
        %v192 = vadd.s32 %v191, 128
        %v193 = vand.u32 %v191, 15
        %v194 = vand.u32 %v192, 15
        %196 = vst [vmem:[#allocation1] ss:$2 sm:$0xff] %v189
        %v197 = vld.sshfl [vmem:[#allocation1] sm:$0xff pattern:$0x75316420]
        %v198 = vld.sshfl [vmem:[#allocation1 + $0x8] sm:$0xff pattern:$0x75316420]
        %201 = vrot.lane.b32.xlu0 %v197, 17
        %v202 = vpop.permute.xlu0 %201
        %203 = vrot.lane.b32.xlu0 %v198, 17
        %v204 = vpop.permute.xlu0 %203
        %vm205 = vcmp.lt.s32.totalorder %v191, 17
        %v206 = vsel %vm205, %v202, %v204
        %v207 = vsel %vm205, %v204, %v202
        %vm208 = vcmp.ge.s32.totalorder %v191, 16
        %vm209 = vcmp.ge.s32.totalorder %v192, 16
        %vm210 = vcmp.ge.s32.totalorder %v193, 1
        %vm211 = vcmp.ge.s32.totalorder %v194, 1
        %vm212 = vmand %vm208, %vm210
        %vm213 = vmand %vm209, %vm211
        %v214 = vsel %vm212, %v207, 0.0
        %v215 = vsel %vm213, %v206, 0.0
        %v216 = vld [vmem:[%s1] sm:$0xf]
        %218 = vset.pattern.permute.xlu0 0
        %219 = vperm.xlu0 %218, %v216
        %v220 = vpop.permute.xlu0 %219
        %v222 = vmul.f32 %v214, %v220
        %v223 = vmul.f32 %v215, %v220
        %224 = vst [vmem:[#allocation1] ss:$2 sm:$0xff] %v189
        %v225 = vld.sshfl [vmem:[#allocation1] sm:$0xff pattern:$0x75316420]
        %v226 = vld.sshfl [vmem:[#allocation1 + $0x8] sm:$0xff pattern:$0x75316420]
        %229 = vrot.lane.b32.xlu0 %v225, 16
        %v230 = vpop.permute.xlu0 %229
        %231 = vrot.lane.b32.xlu0 %v226, 16
        %v232 = vpop.permute.xlu0 %231
        %vm233 = vcmp.lt.s32.totalorder %v191, 16
        %v234 = vsel %vm233, %v230, %v232
        %v235 = vsel %vm233, %v232, %v230
        %v236 = vsel %vm208, %v235, 0.0
        %v237 = vsel %vm209, %v234, 0.0
        %v238 = vld [vmem:[%s1] sm:$0xf]
        %240 = vset.pattern.permute.xlu0 1
        %241 = vperm.xlu0 %240, %v238
        %v242 = vpop.permute.xlu0 %241
        %v244 = vmul.f32 %v236, %v242
        %v245 = vmul.f32 %v237, %v242
        %v246 = vadd.f32 %v222, %v244
        %v247 = vadd.f32 %v223, %v245
        %248 = vst [vmem:[#allocation1] ss:$2 sm:$0xff] %v189
        %v249 = vld.sshfl [vmem:[#allocation1] sm:$0xff pattern:$0x75316420]
        %v250 = vld.sshfl [vmem:[#allocation1 + $0x8] sm:$0xff pattern:$0x75316420]
        %253 = vrot.lane.b32.xlu0 %v249, 15
        %v254 = vpop.permute.xlu0 %253
        %255 = vrot.lane.b32.xlu0 %v250, 15
        %v256 = vpop.permute.xlu0 %255
        %vm257 = vcmp.lt.s32.totalorder %v191, 15
        %v258 = vsel %vm257, %v254, %v256
        %v259 = vsel %vm257, %v256, %v254
        %vm260 = vcmp.lt.s32.totalorder %v193, 15
        %vm261 = vcmp.lt.s32.totalorder %v194, 15
        %vm262 = vmand %vm208, %vm260
        %vm263 = vmand %vm209, %vm261
        %v264 = vsel %vm262, %v259, 0.0
        %v265 = vsel %vm263, %v258, 0.0
        %v266 = vld [vmem:[%s1] sm:$0xf]
        %268 = vset.pattern.permute.xlu0 2
        %269 = vperm.xlu0 %268, %v266
        %v270 = vpop.permute.xlu0 %269
        %v272 = vmul.f32 %v264, %v270
        %v273 = vmul.f32 %v265, %v270
        %v274 = vadd.f32 %v246, %v272
        %v275 = vadd.f32 %v247, %v273
        %276 = vst [vmem:[#allocation1] ss:$2 sm:$0xff] %v189
        %v277 = vld.sshfl [vmem:[#allocation1] sm:$0xff pattern:$0x75316420]
        %v278 = vld.sshfl [vmem:[#allocation1 + $0x8] sm:$0xff pattern:$0x75316420]
        %281 = vrot.lane.b32.xlu0 %v277, 1
        %v282 = vpop.permute.xlu0 %281
        %283 = vrot.lane.b32.xlu0 %v278, 1
        %v284 = vpop.permute.xlu0 %283
        %vm285 = vcmp.lt.s32.totalorder %v191, 1
        %v286 = vsel %vm285, %v282, %v284
        %v287 = vsel %vm285, %v284, %v282
        %v288 = vsel %vm210, %v287, 0.0
        %v289 = vsel %vm211, %v286, 0.0
        %v290 = vld [vmem:[%s1] sm:$0xf]
        %292 = vset.pattern.permute.xlu0 3
        %293 = vperm.xlu0 %292, %v290
        %v294 = vpop.permute.xlu0 %293
        %v296 = vmul.f32 %v288, %v294
        %v297 = vmul.f32 %v289, %v294
        %v298 = vadd.f32 %v274, %v296
        %v299 = vadd.f32 %v275, %v297
        %300 = vset.pattern.permute.xlu0 4
        %301 = vperm.xlu0 %300, %v290
        %v302 = vpop.permute.xlu0 %301
        %v304 = vunpack.c.l.s4 839922192
        %v305 = vunpack.c.0.s8 %v304
        %v306 = vperm.slane %v302, %v305
        %v308 = vmul.f32 %v189, %v306
        %310 = vst [vmem:[#allocation1] ss:$2 sm:$0xff] %v308
        %v311 = vld.sshfl [vmem:[#allocation1] sm:$0xff pattern:$0x75316420]
        %v312 = vld.sshfl [vmem:[#allocation1 + $0x8] sm:$0xff pattern:$0x75316420]
        %v315 = vadd.f32 %v298, %v311
        %v316 = vadd.f32 %v299, %v312
        %317 = vst [vmem:[#allocation1] ss:$2 sm:$0xff] %v189
        %v318 = vld.sshfl [vmem:[#allocation1] sm:$0xff pattern:$0x75316420]
        %v319 = vld.sshfl [vmem:[#allocation1 + $0x8] sm:$0xff pattern:$0x75316420]
        %322 = vrot.lane.b32.xlu0 %v318, 127
        %v323 = vpop.permute.xlu0 %322
        %324 = vrot.lane.b32.xlu0 %v319, 127
        %v325 = vpop.permute.xlu0 %324
        %vm326 = vcmp.lt.s32.totalorder %v191, 127
        %v327 = vsel %vm326, %v323, %v325
        %v328 = vsel %vm326, %v325, %v323
        %v329 = vsel %vm260, %v327, 0.0
        %v330 = vsel %vm261, %v328, 0.0
        %v331 = vld [vmem:[%s1] sm:$0xf]
        %333 = vset.pattern.permute.xlu0 5
        %334 = vperm.xlu0 %333, %v331
        %v335 = vpop.permute.xlu0 %334
        %v337 = vmul.f32 %v329, %v335
        %v338 = vmul.f32 %v330, %v335
        %v339 = vadd.f32 %v315, %v337
        %v340 = vadd.f32 %v316, %v338
        %341 = vst [vmem:[#allocation1] ss:$2 sm:$0xff] %v189
        %v342 = vld.sshfl [vmem:[#allocation1] sm:$0xff pattern:$0x75316420]
        %v343 = vld.sshfl [vmem:[#allocation1 + $0x8] sm:$0xff pattern:$0x75316420]
        %346 = vrot.lane.b32.xlu0 %v342, 113
        %v347 = vpop.permute.xlu0 %346
        %348 = vrot.lane.b32.xlu0 %v343, 113
        %v349 = vpop.permute.xlu0 %348
        %vm350 = vcmp.lt.s32.totalorder %v191, 113
        %v351 = vsel %vm350, %v347, %v349
        %v352 = vsel %vm350, %v349, %v347
        %vm353 = vcmp.lt.s32.totalorder %v191, 240
        %vm354 = vcmp.lt.s32.totalorder %v192, 240
        %vm355 = vmand %vm353, %vm210
        %vm356 = vmand %vm354, %vm211
        %v357 = vsel %vm355, %v351, 0.0
        %v358 = vsel %vm356, %v352, 0.0
        %v359 = vld [vmem:[%s1] sm:$0xf]
        %361 = vset.pattern.permute.xlu0 6
        %362 = vperm.xlu0 %361, %v359
        %v363 = vpop.permute.xlu0 %362
        %v365 = vmul.f32 %v357, %v363
        %v366 = vmul.f32 %v358, %v363
        %v367 = vadd.f32 %v339, %v365
        %v368 = vadd.f32 %v340, %v366
        %369 = vst [vmem:[#allocation1] ss:$2 sm:$0xff] %v189
        %v370 = vld.sshfl [vmem:[#allocation1] sm:$0xff pattern:$0x75316420]
        %v371 = vld.sshfl [vmem:[#allocation1 + $0x8] sm:$0xff pattern:$0x75316420]
        %374 = vrot.lane.b32.xlu0 %v370, 112
        %v375 = vpop.permute.xlu0 %374
        %376 = vrot.lane.b32.xlu0 %v371, 112
        %v377 = vpop.permute.xlu0 %376
        %vm378 = vcmp.lt.s32.totalorder %v191, 112
        %v379 = vsel %vm378, %v375, %v377
        %v380 = vsel %vm378, %v377, %v375
        %v381 = vsel %vm353, %v379, 0.0
        %v382 = vsel %vm354, %v380, 0.0
        %v383 = vld [vmem:[%s1] sm:$0xf]
        %385 = vset.pattern.permute.xlu0 7
        %386 = vperm.xlu0 %385, %v383
        %v387 = vpop.permute.xlu0 %386
        %v389 = vmul.f32 %v381, %v387
        %v390 = vmul.f32 %v382, %v387
        %v391 = vadd.f32 %v367, %v389
        %v392 = vadd.f32 %v368, %v390
        %393 = vst [vmem:[#allocation1] ss:$2 sm:$0xff] %v189
        %v394 = vld.sshfl [vmem:[#allocation1] sm:$0xff pattern:$0x75316420]
        %v395 = vld.sshfl [vmem:[#allocation1 + $0x8] sm:$0xff pattern:$0x75316420]
        %398 = vrot.lane.b32.xlu0 %v394, 111
        %v399 = vpop.permute.xlu0 %398
        %400 = vrot.lane.b32.xlu0 %v395, 111
        %v401 = vpop.permute.xlu0 %400
        %vm402 = vcmp.lt.s32.totalorder %v191, 111
        %v403 = vsel %vm402, %v399, %v401
        %v404 = vsel %vm402, %v401, %v399
        %vm405 = vmand %vm353, %vm260
        %vm406 = vmand %vm354, %vm261
        %v407 = vsel %vm405, %v403, 0.0
        %v408 = vsel %vm406, %v404, 0.0
        %v409 = vld [vmem:[%s1] sm:$0xf]
        %411 = vset.pattern.permute.xlu0 8
        %412 = vperm.xlu0 %411, %v409
        %v413 = vpop.permute.xlu0 %412
        %v415 = vmul.f32 %v407, %v413
        %v416 = vmul.f32 %v408, %v413
        %v417 = vadd.f32 %v391, %v415
        %v418 = vadd.f32 %v392, %v416
        %v419 = vld [vmem:[%s2] sm:$0xff]
        %v420 = vperm.slane %v417, 0
        %v421 = vperm.slane %v418, 0
        %423 = vset.pattern.permute.xlu0 0
        %424 = vperm.xlu0 %423, %v419
        %v425 = vpop.permute.xlu0 %424
        %v427 = vmul.f32 %v420, %v425
        %v428 = vmul.f32 %v421, %v425
        %v429 = vperm.slane %v417, 1
        %v430 = vperm.slane %v418, 1
        %431 = vset.pattern.permute.xlu0 1
        %432 = vperm.xlu0 %431, %v419
        %v433 = vpop.permute.xlu0 %432
        %v435 = vmul.f32 %v429, %v433
        %v436 = vmul.f32 %v430, %v433
        %v437 = vadd.f32 %v427, %v435
        %v438 = vadd.f32 %v428, %v436
        %v439 = vperm.slane %v417, 2
        %v440 = vperm.slane %v418, 2
        %441 = vset.pattern.permute.xlu0 2
        %442 = vperm.xlu0 %441, %v419
        %v443 = vpop.permute.xlu0 %442
        %v445 = vmul.f32 %v439, %v443
        %v446 = vmul.f32 %v440, %v443
        %v447 = vadd.f32 %v437, %v445
        %v448 = vadd.f32 %v438, %v446
        %v449 = vperm.slane %v417, 3
        %v450 = vperm.slane %v418, 3
        %451 = vset.pattern.permute.xlu0 3
        %452 = vperm.xlu0 %451, %v419
        %v453 = vpop.permute.xlu0 %452
        %v455 = vmul.f32 %v449, %v453
        %v456 = vmul.f32 %v450, %v453
        %v457 = vadd.f32 %v447, %v455
        %v458 = vadd.f32 %v448, %v456
        %459 = vst [vmem:[%s188] sm:$0xff] %v457
        %460 = vst [vmem:[%s188 + $0x8] sm:$0xff] %v458
        %s461 = sand.u32 %s96, 1
        %s462 = scalar_lea.sflag [#allocation4], %s461
        %s463 = sand.u32 %s96, 1
        %s464 = smul.addr %s463, 16
        %s465 = scalar_lea.vmem [#allocation5], %s464
        // Predicated region
        $region37: #{tpu_custom_call.1} parent=31 // pred_check
          %p466 = pneg %p106
        $region38: #{tpu_custom_call.1} parent=31 // pred_check_branch
          %468 = sbr.rel (%p466) target = $region40
        $region39: #{tpu_custom_call.1} parent=31 // pred_region
          %470 = vsyncadd %s462, 0
          %s471 = smul.addr %s20, 2
          %s472 = smul.addr %s471, 8
          %s473 = scalar_lea.hbm %s3, %s472
          %s475 = sshll.u32 %s465, 4
          %s476 = int_to_ptr.vmem [resolvable:$true] %s475
          %s477 = sshll.u32 %s473, 4
          %s478 = int_to_ptr.hbm [resolvable:$true] %s477
          %480 = dma.vmem_to_hbm [thread:$0]  %s476, 256, %s478, %s462
        $region40: #{tpu_custom_call.1} parent=31 // pred_fallthru
          _
      $region32: #{tpu_custom_call.1} parent=5 // pred_fallthru
        _
      %p481 = scmp.le.s32.totalorder 2, %s15
      // Predicated region
      $region41: #{tpu_custom_call.1} parent=5 // pred_check
        %p482 = pneg %p481
      $region42: #{tpu_custom_call.1} parent=5 // pred_check_branch
        %484 = sbr.rel (%p482) target = $region44
      $region43: #{tpu_custom_call.1} parent=5 // pred_region
        %s485 = ssub.s32 %s15, 2
        // Predicated region
        $region45: #{tpu_custom_call.1} parent=43 // pred_check
          %p486 = pneg %p112
        $region46: #{tpu_custom_call.1} parent=43 // pred_check_branch
          %488 = sbr.rel (%p486) target = $region48
        $region47: #{tpu_custom_call.1} parent=43 // pred_region
          %s489 = sand.u32 %s97, 1
          %s490 = scalar_lea.sflag [#allocation4], %s489
          %s491 = sand.u32 %s97, 1
          %s492 = smul.addr %s491, 16
          %s493 = scalar_lea.vmem [#allocation5], %s492
          %495 = dma.done %s490, 256
        $region48: #{tpu_custom_call.1} parent=43 // pred_fallthru
          _
      $region44: #{tpu_custom_call.1} parent=5 // pred_fallthru
        _
    $region6: #{tpu_custom_call.1} parent=1 // loop_footer
      %s19 = sadd.s32 1, %s15
    $region7: #{tpu_custom_call.1} parent=1 // loop_footer_branch
      %14 = sbr.rel target = $region3
    $region8: #{tpu_custom_call.1} parent=1 // loop_exit
      _
    %496 = vsyncpa [#allocation3], 1
    %s497 = scalar_lea.sflag [#allocation3], 1
    %498 = vsyncpa %s497, 1
    %499 = vsyncpa [#allocation4], 1
    %s500 = scalar_lea.sflag [#allocation4], 1
    %501 = vsyncpa %s500, 1

</llo_original>
